<compile_context>
chip_gen: v6e
topology: v6e:2x2x1
jax: 0.10.0
libtpu: 0.0.40
codegen_flags: <defaults>
</compile_context>

<pallas_src>
import functools

import jax
import jax.numpy as jnp
from jax.experimental import pallas as pl
from jax.experimental.pallas import tpu as pltpu

_LANE = 128     # lane width: last dim of every operand padded to this
_SUBLANE = 16   # batch-tile granularity (works for both f32 and bf16 blocks)


def _round_up(x, m):
    return ((x + m - 1) // m) * m


def _mlp_kernel(x_ref, w_in_ref, b_in_ref, w_h_ref, b_h_ref,
                w_out_ref, b_out_ref, o_ref, *, num_hidden):
    cdt = w_in_ref.dtype  # MXU operand dtype (f32 or bf16); accumulation is f32

    # input layer: y = relu(x @ W_in + b_in)
    x = x_ref[...]                                            # (TB, D_in_p)
    z = jnp.dot(x, w_in_ref[...], preferred_element_type=jnp.float32)
    y = jnp.maximum(z + b_in_ref[...], 0.0).astype(cdt)

    # hidden layers (static unroll — num_hidden is a compile-time constant).
    # Bias stack is small; load it once outside the unrolled loop.
    b_h = b_h_ref[...]                                        # (H, 1, L_p) f32
    for i in range(num_hidden):
        z = jnp.dot(y, w_h_ref[i], preferred_element_type=jnp.float32)
        y = jnp.maximum(z + b_h[i], 0.0).astype(cdt)

    # output layer (no activation)
    out = jnp.dot(y, w_out_ref[...], preferred_element_type=jnp.float32)
    o_ref[...] = (out + b_out_ref[...]).astype(o_ref.dtype)


def mlp_forward(x, params, *, batch_tile=None, compute_dtype=jnp.float32):
    """Run the fused MLP kernel.

    x:      (B, D_in) float32
    params: dict with
        w_in  (D_in, L),  b_in  (1, L)
        w_h   (H, L, L),  b_h   (H, 1, L)
        w_out (L, D_out), b_out (1, D_out)
    compute_dtype: dtype fed to the MXU (jnp.float32 or jnp.bfloat16).
                   Accumulation is always f32.
    """
    w_in, b_in = params["w_in"], params["b_in"]
    w_h, b_h = params["w_h"], params["b_h"]
    w_out, b_out = params["w_out"], params["b_out"]

    B, D_in = x.shape
    L = w_in.shape[1]
    H = w_h.shape[0]
    D_out = w_out.shape[1]
    out_dtype = x.dtype
    cdt = jnp.dtype(compute_dtype)

    # ---- lane-dense padding of every feature dim to a multiple of 128 ----
    D_in_p = _round_up(D_in, _LANE)
    L_p = _round_up(L, _LANE)
    D_out_p = _round_up(D_out, _LANE)

    # ---- batch tile: multiple of 16 sublanes, capped at 512 for pipelining ----
    if batch_tile is None:
        tb = min(512, _round_up(B, _SUBLANE))
    else:
        tb = _round_up(batch_tile, _SUBLANE)
    B_p = _round_up(B, tb)
    grid = (B_p // tb,)

    def pad2(a, r, c, dt):
        return jnp.pad(a, ((0, r - a.shape[0]), (0, c - a.shape[1]))).astype(dt)

    def pad3(a, r, c, dt):
        return jnp.pad(
            a, ((0, 0), (0, r - a.shape[1]), (0, c - a.shape[2]))).astype(dt)

    # Zero-padding is exact: padded input columns / weight rows contribute 0,
    # padded output columns are sliced off below.
    x_p = pad2(x, B_p, D_in_p, cdt)
    w_in_p = pad2(w_in, D_in_p, L_p, cdt)
    b_in_p = pad2(b_in, 1, L_p, jnp.float32)
    w_h_p = pad3(w_h, L_p, L_p, cdt)
    b_h_p = pad3(b_h, 1, L_p, jnp.float32)
    w_out_p = pad2(w_out, L_p, D_out_p, cdt)
    b_out_p = pad2(b_out, 1, D_out_p, jnp.float32)

    # ---- VMEM budget + cost estimate ----
    w_bytes = (D_in_p * L_p + H * L_p * L_p + L_p * D_out_p) * cdt.itemsize
    b_bytes = (L_p + H * L_p + D_out_p) * 4
    act_bytes = tb * (D_in_p * cdt.itemsize + D_out_p * 4 + 2 * L_p * 4)
    est_vmem = 2 * (w_bytes + b_bytes + act_bytes)        # pipeline double-buffers
    # Clamp to 64 MiB so the request is valid on v7x (64 MiB physical / TC).
    vmem_limit = int(min(max(2 * est_vmem, 16 * 2**20), 64 * 2**20))

    flops = 2 * B_p * (D_in_p * L_p + H * L_p * L_p + L_p * D_out_p)
    bytes_accessed = (B_p * D_in_p * cdt.itemsize + w_bytes + b_bytes
                      + B_p * D_out_p * jnp.dtype(out_dtype).itemsize)

    kernel = functools.partial(_mlp_kernel, num_hidden=H)

    out_padded = pl.pallas_call(
        kernel,
        out_shape=jax.ShapeDtypeStruct((B_p, D_out_p), out_dtype),
        grid_spec=pltpu.PrefetchScalarGridSpec(
            num_scalar_prefetch=0,
            grid=grid,
            in_specs=[
                pl.BlockSpec((tb, D_in_p), lambda i: (i, 0)),      # x (batch-tiled)
                pl.BlockSpec((D_in_p, L_p), lambda i: (0, 0)),     # w_in
                pl.BlockSpec((1, L_p), lambda i: (0, 0)),          # b_in
                pl.BlockSpec((H, L_p, L_p), lambda i: (0, 0, 0)),  # stacked hidden W
                pl.BlockSpec((H, 1, L_p), lambda i: (0, 0, 0)),    # stacked hidden b
                pl.BlockSpec((L_p, D_out_p), lambda i: (0, 0)),    # w_out
                pl.BlockSpec((1, D_out_p), lambda i: (0, 0)),      # b_out
            ],
            out_specs=pl.BlockSpec((tb, D_out_p), lambda i: (i, 0)),
        ),
        compiler_params=pltpu.CompilerParams(
            dimension_semantics=("parallel",),
            vmem_limit_bytes=vmem_limit),
        cost_estimate=pl.CostEstimate(
            flops=int(flops),
            transcendentals=0,
            bytes_accessed=int(bytes_accessed)),
    )(x_p, w_in_p, b_in_p, w_h_p, b_h_p, w_out_p, b_out_p)

    # slice off batch + lane padding
    return out_padded[:B, :D_out]


def init_params(key, D_in, D_out, layer_size, num_hidden):
    """Deterministic init matching torch.nn.Linear's U(-1/sqrt(fan_in), +...)."""
    ks = jax.random.split(key, 6)

    def uniform(k, shape, fan_in):
        bound = 1.0 / jnp.sqrt(jnp.float32(fan_in))
        return jax.random.uniform(k, shape, jnp.float32, -bound, bound)

    return {
        "w_in": uniform(ks[0], (D_in, layer_size), D_in),
        "b_in": uniform(ks[1], (1, layer_size), D_in),
        "w_h": uniform(ks[2], (num_hidden, layer_size, layer_size), layer_size),
        "b_h": uniform(ks[3], (num_hidden, 1, layer_size), layer_size),
        "w_out": uniform(ks[4], (layer_size, D_out), layer_size),
        "b_out": uniform(ks[5], (1, D_out), layer_size),
    }


def mlp_reference(x, params):
    """Pure-JAX reference implementing the same forward pass."""
    y = jnp.maximum(x @ params["w_in"] + params["b_in"], 0.0)
    for i in range(params["w_h"].shape[0]):
        y = jnp.maximum(y @ params["w_h"][i] + params["b_h"][i], 0.0)
    return y @ params["w_out"] + params["b_out"]


if __name__ == "__main__":
    # Small shapes consistent with NN(D_in, D_out, layer_size, num_hidden)
    D_in, D_out, layer_size, num_hidden = 4, 2, 32, 3
    batch = 8

    key = jax.random.PRNGKey(0)
    k_x, k_p = jax.random.split(key)

    x = jax.random.normal(k_x, (batch, D_in), dtype=jnp.float32)
    params = init_params(k_p, D_in, D_out, layer_size, num_hidden)

    ref = mlp_reference(x, params)

    # f32-operand path: exact match to the reference.
    out = jax.block_until_ready(mlp_forward(x, params))
    assert out.shape == (batch, D_out)
    assert jnp.allclose(out, ref, atol=1e-5, rtol=1e-5)

    # bf16-MXU path (peak throughput on v6e/v7x): f32 accumulation, looser tol.
    out_bf16 = jax.block_until_ready(
        mlp_forward(x, params, compute_dtype=jnp.bfloat16))
    assert out_bf16.shape == (batch, D_out)
    assert jnp.allclose(out_bf16, ref, atol=1e-1, rtol=1e-1)

    print("KERNEL_OK")
</pallas_src>

<mosaic_0001>
module attributes {stable_mosaic.version = 11 : i64} {
  func.func @_mlp_kernel(%arg0: i32, %arg1: memref<16x128xf32, #tpu.memory_space<vmem>>, %arg2: memref<128x128xf32, #tpu.memory_space<vmem>>, %arg3: memref<1x128xf32, #tpu.memory_space<vmem>>, %arg4: memref<3x128x128xf32, #tpu.memory_space<vmem>>, %arg5: memref<3x1x128xf32, #tpu.memory_space<vmem>>, %arg6: memref<128x128xf32, #tpu.memory_space<vmem>>, %arg7: memref<1x128xf32, #tpu.memory_space<vmem>>, %arg8: memref<16x128xf32, #tpu.memory_space<vmem>>) attributes {dimension_semantics = [#tpu.dimension_semantics<parallel>], iteration_bounds = array<i64: 1>, scalar_prefetch = 0 : i64, scratch_operands = 0 : i64, tpu.core_type = #tpu.core_type<tc>, window_params = [{transform_indices = @transform_0, window_bounds = array<i64: 16, 128>}, {pipeline_mode = #tpu.pipeline_mode<synchronous>, transform_indices = @transform_1, window_bounds = array<i64: 128, 128>}, {pipeline_mode = #tpu.pipeline_mode<synchronous>, transform_indices = @transform_2, window_bounds = array<i64: 1, 128>}, {pipeline_mode = #tpu.pipeline_mode<synchronous>, transform_indices = @transform_3, window_bounds = array<i64: 3, 128, 128>}, {pipeline_mode = #tpu.pipeline_mode<synchronous>, transform_indices = @transform_4, window_bounds = array<i64: 3, 1, 128>}, {pipeline_mode = #tpu.pipeline_mode<synchronous>, transform_indices = @transform_5, window_bounds = array<i64: 128, 128>}, {pipeline_mode = #tpu.pipeline_mode<synchronous>, transform_indices = @transform_6, window_bounds = array<i64: 1, 128>}, {transform_indices = @transform_7, window_bounds = array<i64: 16, 128>}]} {
    %c0 = arith.constant 0 : index
    %c0_0 = arith.constant 0 : index
    %0 = vector.load %arg1[%c0, %c0_0] : memref<16x128xf32, #tpu.memory_space<vmem>>, vector<16x128xf32>
    %c0_1 = arith.constant 0 : index
    %c0_2 = arith.constant 0 : index
    %1 = vector.load %arg2[%c0_1, %c0_2] : memref<128x128xf32, #tpu.memory_space<vmem>>, vector<128x128xf32>
    %cst = arith.constant dense<0.000000e+00> : vector<16x128xf32>
    %2 = tpu.matmul %0, %1, %cst {dimension_numbers = #tpu.dot_dimension_numbers<[1], [0], [0], [1], [0, 0, 1, 1], [], []>} : vector<16x128xf32>, vector<128x128xf32>, vector<16x128xf32> -> vector<16x128xf32>
    %c0_3 = arith.constant 0 : index
    %c0_4 = arith.constant 0 : index
    %3 = vector.load %arg3[%c0_3, %c0_4] : memref<1x128xf32, #tpu.memory_space<vmem>>, vector<1x128xf32>
    %4 = vector.broadcast %3 : vector<1x128xf32> to vector<16x128xf32>
    %5 = arith.addf %2, %4 : vector<16x128xf32>
    %cst_5 = arith.constant 0.000000e+00 : f32
    %6 = vector.broadcast %cst_5 : f32 to vector<16x128xf32>
    %7 = arith.maximumf %5, %6 : vector<16x128xf32>
    %c0_6 = arith.constant 0 : index
    %c0_7 = arith.constant 0 : index
    %c0_8 = arith.constant 0 : index
    %8 = vector.load %arg5[%c0_6, %c0_7, %c0_8] : memref<3x1x128xf32, #tpu.memory_space<vmem>>, vector<3x1x128xf32>
    %c0_9 = arith.constant 0 : index
    %c0_10 = arith.constant 0 : index
    %c0_11 = arith.constant 0 : index
    %9 = vector.load %arg4[%c0_9, %c0_10, %c0_11] : memref<3x128x128xf32, #tpu.memory_space<vmem>>, vector<1x128x128xf32>
    %10 = vector.shape_cast %9 : vector<1x128x128xf32> to vector<128x128xf32>
    %cst_12 = arith.constant dense<0.000000e+00> : vector<16x128xf32>
    %11 = tpu.matmul %7, %10, %cst_12 {dimension_numbers = #tpu.dot_dimension_numbers<[1], [0], [0], [1], [0, 0, 1, 1], [], []>} : vector<16x128xf32>, vector<128x128xf32>, vector<16x128xf32> -> vector<16x128xf32>
    %12 = vector.extract_strided_slice %8 {offsets = [0, 0, 0], sizes = [1, 1, 128], strides = [1, 1, 1]} : vector<3x1x128xf32> to vector<1x1x128xf32>
    %13 = vector.shape_cast %12 : vector<1x1x128xf32> to vector<1x128xf32>
    %14 = vector.broadcast %13 : vector<1x128xf32> to vector<16x128xf32>
    %15 = arith.addf %11, %14 : vector<16x128xf32>
    %cst_13 = arith.constant 0.000000e+00 : f32
    %16 = vector.broadcast %cst_13 : f32 to vector<16x128xf32>
    %17 = arith.maximumf %15, %16 : vector<16x128xf32>
    %c1 = arith.constant 1 : index
    %c0_14 = arith.constant 0 : index
    %c0_15 = arith.constant 0 : index
    %18 = vector.load %arg4[%c1, %c0_14, %c0_15] : memref<3x128x128xf32, #tpu.memory_space<vmem>>, vector<1x128x128xf32>
    %19 = vector.shape_cast %18 : vector<1x128x128xf32> to vector<128x128xf32>
    %cst_16 = arith.constant dense<0.000000e+00> : vector<16x128xf32>
    %20 = tpu.matmul %17, %19, %cst_16 {dimension_numbers = #tpu.dot_dimension_numbers<[1], [0], [0], [1], [0, 0, 1, 1], [], []>} : vector<16x128xf32>, vector<128x128xf32>, vector<16x128xf32> -> vector<16x128xf32>
    %21 = vector.extract_strided_slice %8 {offsets = [1, 0, 0], sizes = [1, 1, 128], strides = [1, 1, 1]} : vector<3x1x128xf32> to vector<1x1x128xf32>
    %22 = vector.shape_cast %21 : vector<1x1x128xf32> to vector<1x128xf32>
    %23 = vector.broadcast %22 : vector<1x128xf32> to vector<16x128xf32>
    %24 = arith.addf %20, %23 : vector<16x128xf32>
    %cst_17 = arith.constant 0.000000e+00 : f32
    %25 = vector.broadcast %cst_17 : f32 to vector<16x128xf32>
    %26 = arith.maximumf %24, %25 : vector<16x128xf32>
    %c2 = arith.constant 2 : index
    %c0_18 = arith.constant 0 : index
    %c0_19 = arith.constant 0 : index
    %27 = vector.load %arg4[%c2, %c0_18, %c0_19] : memref<3x128x128xf32, #tpu.memory_space<vmem>>, vector<1x128x128xf32>
    %28 = vector.shape_cast %27 : vector<1x128x128xf32> to vector<128x128xf32>
    %cst_20 = arith.constant dense<0.000000e+00> : vector<16x128xf32>
    %29 = tpu.matmul %26, %28, %cst_20 {dimension_numbers = #tpu.dot_dimension_numbers<[1], [0], [0], [1], [0, 0, 1, 1], [], []>} : vector<16x128xf32>, vector<128x128xf32>, vector<16x128xf32> -> vector<16x128xf32>
    %30 = vector.extract_strided_slice %8 {offsets = [2, 0, 0], sizes = [1, 1, 128], strides = [1, 1, 1]} : vector<3x1x128xf32> to vector<1x1x128xf32>
    %31 = vector.shape_cast %30 : vector<1x1x128xf32> to vector<1x128xf32>
    %32 = vector.broadcast %31 : vector<1x128xf32> to vector<16x128xf32>
    %33 = arith.addf %29, %32 : vector<16x128xf32>
    %cst_21 = arith.constant 0.000000e+00 : f32
    %34 = vector.broadcast %cst_21 : f32 to vector<16x128xf32>
    %35 = arith.maximumf %33, %34 : vector<16x128xf32>
    %c0_22 = arith.constant 0 : index
    %c0_23 = arith.constant 0 : index
    %36 = vector.load %arg6[%c0_22, %c0_23] : memref<128x128xf32, #tpu.memory_space<vmem>>, vector<128x128xf32>
    %cst_24 = arith.constant dense<0.000000e+00> : vector<16x128xf32>
    %37 = tpu.matmul %35, %36, %cst_24 {dimension_numbers = #tpu.dot_dimension_numbers<[1], [0], [0], [1], [0, 0, 1, 1], [], []>} : vector<16x128xf32>, vector<128x128xf32>, vector<16x128xf32> -> vector<16x128xf32>
    %c0_25 = arith.constant 0 : index
    %c0_26 = arith.constant 0 : index
    %38 = vector.load %arg7[%c0_25, %c0_26] : memref<1x128xf32, #tpu.memory_space<vmem>>, vector<1x128xf32>
    %39 = vector.broadcast %38 : vector<1x128xf32> to vector<16x128xf32>
    %40 = arith.addf %37, %39 : vector<16x128xf32>
    %c0_27 = arith.constant 0 : index
    %c0_28 = arith.constant 0 : index
    %41 = vector.load %arg8[%c0_27, %c0_28] : memref<16x128xf32, #tpu.memory_space<vmem>>, vector<16x128xf32>
    tpu.vector_store %arg8[%c0_27, %c0_28], %40 {strides = array<i32>} : memref<16x128xf32, #tpu.memory_space<vmem>>, vector<16x128xf32>,
    return
  }
  func.func @transform_0(%arg0: i32) -> (i32, i32) {
    %c0_i32 = arith.constant 0 : i32
    %c0_i32_0 = arith.constant 0 : i32
    return %arg0, %c0_i32 : i32, i32
  }
  func.func @transform_1(%arg0: i32) -> (i32, i32) {
    %c0_i32 = arith.constant 0 : i32
    %c0_i32_0 = arith.constant 0 : i32
    %c0_i32_1 = arith.constant 0 : i32
    return %c0_i32, %c0_i32_0 : i32, i32
  }
  func.func @transform_2(%arg0: i32) -> (i32, i32) {
    %c0_i32 = arith.constant 0 : i32
    %c0_i32_0 = arith.constant 0 : i32
    %c0_i32_1 = arith.constant 0 : i32
    return %c0_i32, %c0_i32_0 : i32, i32
  }
  func.func @transform_3(%arg0: i32) -> (i32, i32, i32) {
    %c0_i32 = arith.constant 0 : i32
    %c0_i32_0 = arith.constant 0 : i32
    %c0_i32_1 = arith.constant 0 : i32
    %c0_i32_2 = arith.constant 0 : i32
    return %c0_i32, %c0_i32_0, %c0_i32_1 : i32, i32, i32
  }
  func.func @transform_4(%arg0: i32) -> (i32, i32, i32) {
    %c0_i32 = arith.constant 0 : i32
    %c0_i32_0 = arith.constant 0 : i32
    %c0_i32_1 = arith.constant 0 : i32
    %c0_i32_2 = arith.constant 0 : i32
    return %c0_i32, %c0_i32_0, %c0_i32_1 : i32, i32, i32
  }
  func.func @transform_5(%arg0: i32) -> (i32, i32) {
    %c0_i32 = arith.constant 0 : i32
    %c0_i32_0 = arith.constant 0 : i32
    %c0_i32_1 = arith.constant 0 : i32
    return %c0_i32, %c0_i32_0 : i32, i32
  }
  func.func @transform_6(%arg0: i32) -> (i32, i32) {
    %c0_i32 = arith.constant 0 : i32
    %c0_i32_0 = arith.constant 0 : i32
    %c0_i32_1 = arith.constant 0 : i32
    return %c0_i32, %c0_i32_0 : i32, i32
  }
  func.func @transform_7(%arg0: i32) -> (i32, i32) {
    %c0_i32 = arith.constant 0 : i32
    %c0_i32_0 = arith.constant 0 : i32
    return %arg0, %c0_i32 : i32, i32
  }
}

</mosaic_0001>

<llo_original>
// kernel: tpu_custom_call.1
$region0: #{tpu_custom_call.1}
  #allocation0 [shape = 'u32[]', space=smem, size = 0x4, offset = 0x4, fixed_abs, tag = 'smem constant byte address 0x4 - core index']
  #allocation1 [shape = 'u32[144,128]{1,0:T(1,128)}', space=vmem, size = 0x12000, scoped, tag = 'internal scratch']
  %s0 = inlined_call_operand.hbm [shape: f32[16,128], index: 0, kind: input, shape index: {}]
  %s1 = inlined_call_operand.hbm [shape: f32[128,128], index: 1, kind: input, shape index: {}]
  %s2 = inlined_call_operand.vmem [shape: f32[1,128], index: 2, kind: input, shape index: {}]
  %s3 = inlined_call_operand.hbm [shape: f32[3,128,128], index: 3, kind: input, shape index: {}]
  %s4 = inlined_call_operand.vmem [shape: f32[3,1,128], index: 4, kind: input, shape index: {}]
  %s5 = inlined_call_operand.hbm [shape: f32[128,128], index: 5, kind: input, shape index: {}]
  %s6 = inlined_call_operand.vmem [shape: f32[1,128], index: 6, kind: input, shape index: {}]
  %s7 = inlined_call_operand.hbm [shape: f32[16,128], index: 7, kind: output, shape index: {}]
  %s8 = sld [smem:[#allocation0]]
  $region54: #{tpu_custom_call.1} parent=0
    _
  %s10 = ssub.s32 1, %s8
  %s11 = scalar_select 0, %s10, %s8
  $region1: #{tpu_custom_call.1} parent=0
    #allocation2 [shape = 'u8[8192]{0}', space=vmem, size = 0x2000, scoped, tag = 'input window, operand 0, single buffered']
    #allocation3 [shape = 's32[1]{0}', space=sflag, size = 0x4, scoped, tag = 'scoped memory for tpu_custom_call.1']
    #allocation4 [shape = 's32[1]{0}', space=sflag, size = 0x4, scoped, tag = 'scoped memory for tpu_custom_call.1']
    #allocation5 [shape = 'u8[65536]{0}', space=vmem, size = 0x10000, scoped, tag = 'input window, operand 1, single buffered']
    #allocation6 [shape = 's32[1]{0}', space=sflag, size = 0x4, scoped, tag = 'scoped memory for tpu_custom_call.1']
    #allocation7 [shape = 'u8[196608]{0}', space=vmem, size = 0x30000, scoped, tag = 'input window, operand 3, single buffered']
    #allocation8 [shape = 'u8[65536]{0}', space=vmem, size = 0x10000, scoped, tag = 'input window, operand 5, single buffered']
    #allocation9 [shape = 's32[1]{0}', space=sflag, size = 0x4, scoped, tag = 'scoped memory for tpu_custom_call.1']
    #allocation10 [shape = 'u8[8192]{0}', space=vmem, size = 0x2000, scoped, tag = 'output window, operand 0, single buffered']
    %12 = vsyncpa [#allocation3], 0
    %13 = vsyncpa [#allocation6], 0
    %14 = vsyncpa [#allocation9], 0
    %15 = vsyncpa [#allocation4], 0
    // Predicated region
    $region2: #{tpu_custom_call.1} parent=1 // pred_check
      _
    $region3: #{tpu_custom_call.1} parent=1 // pred_check_branch
      %17 = sbr.rel (0) target = $region5
    $region4: #{tpu_custom_call.1} parent=1 // pred_region
      %s19 = ssub.s32 256, 256
      %20 = vsyncadd [#allocation3], %s19
      %s21 = sshll.u32 [#allocation2], 4
      %s22 = int_to_ptr.vmem [resolvable:$true] %s21
      %27 = dma.hbm_to_vmem [thread:$0]  %s0, 256, %s22, [#allocation3], 128, 128, 8
    $region5: #{tpu_custom_call.1} parent=1 // pred_fallthru
      _
    // Predicated region
    $region6: #{tpu_custom_call.1} parent=1 // pred_check
      _
    $region7: #{tpu_custom_call.1} parent=1 // pred_check_branch
      %29 = sbr.rel (0) target = $region9
    $region8: #{tpu_custom_call.1} parent=1 // pred_region
      %s31 = ssub.s32 2048, 2048
      %32 = vsyncadd [#allocation6], %s31
      %s33 = sshll.u32 [#allocation5], 4
      %s34 = int_to_ptr.vmem [resolvable:$true] %s33
      %39 = dma.hbm_to_vmem [thread:$0]  %s1, 2048, %s34, [#allocation6], 128, 128, 8
    $region9: #{tpu_custom_call.1} parent=1 // pred_fallthru
      _
    // Predicated region
    $region10: #{tpu_custom_call.1} parent=1 // pred_check
      _
    $region11: #{tpu_custom_call.1} parent=1 // pred_check_branch
      %41 = sbr.rel (0) target = $region13
    $region12: #{tpu_custom_call.1} parent=1 // pred_region
      _
    $region13: #{tpu_custom_call.1} parent=1 // pred_fallthru
      _
    // Predicated region
    $region14: #{tpu_custom_call.1} parent=1 // pred_check
      _
    $region15: #{tpu_custom_call.1} parent=1 // pred_check_branch
      %43 = sbr.rel (0) target = $region17
    $region16: #{tpu_custom_call.1} parent=1 // pred_region
      %s45 = ssub.s32 6144, 6144
      %46 = vsyncadd [#allocation6], %s45
      %s47 = sshll.u32 [#allocation7], 4
      %s48 = int_to_ptr.vmem [resolvable:$true] %s47
      %53 = dma.hbm_to_vmem [thread:$0]  %s3, 6144, %s48, [#allocation6], 128, 128, 8
    $region17: #{tpu_custom_call.1} parent=1 // pred_fallthru
      _
    // Predicated region
    $region18: #{tpu_custom_call.1} parent=1 // pred_check
      _
    $region19: #{tpu_custom_call.1} parent=1 // pred_check_branch
      %55 = sbr.rel (0) target = $region21
    $region20: #{tpu_custom_call.1} parent=1 // pred_region
      _
    $region21: #{tpu_custom_call.1} parent=1 // pred_fallthru
      _
    // Predicated region
    $region22: #{tpu_custom_call.1} parent=1 // pred_check
      _
    $region23: #{tpu_custom_call.1} parent=1 // pred_check_branch
      %57 = sbr.rel (0) target = $region25
    $region24: #{tpu_custom_call.1} parent=1 // pred_region
      %s59 = ssub.s32 2048, 2048
      %60 = vsyncadd [#allocation9], %s59
      %s61 = sshll.u32 [#allocation8], 4
      %s62 = int_to_ptr.vmem [resolvable:$true] %s61
      %67 = dma.hbm_to_vmem [thread:$0]  %s5, 2048, %s62, [#allocation9], 128, 128, 8
    $region25: #{tpu_custom_call.1} parent=1 // pred_fallthru
      _
    // Predicated region
    $region26: #{tpu_custom_call.1} parent=1 // pred_check
      _
    $region27: #{tpu_custom_call.1} parent=1 // pred_check_branch
      %69 = sbr.rel (0) target = $region29
    $region28: #{tpu_custom_call.1} parent=1 // pred_region
      _
    $region29: #{tpu_custom_call.1} parent=1 // pred_fallthru
      _
    // Predicated region
    $region30: #{tpu_custom_call.1} parent=1 // pred_check
      _
    $region31: #{tpu_custom_call.1} parent=1 // pred_check_branch
      %71 = sbr.rel (0) target = $region33
    $region32: #{tpu_custom_call.1} parent=1 // pred_region
      %72 = dma.done [#allocation3], 256
    $region33: #{tpu_custom_call.1} parent=1 // pred_fallthru
      _
    // Predicated region
    $region34: #{tpu_custom_call.1} parent=1 // pred_check
      _
    $region35: #{tpu_custom_call.1} parent=1 // pred_check_branch
      %74 = sbr.rel (0) target = $region37
    $region36: #{tpu_custom_call.1} parent=1 // pred_region
      %75 = dma.done [#allocation6], 2048
    $region37: #{tpu_custom_call.1} parent=1 // pred_fallthru
      _
    // Predicated region
    $region38: #{tpu_custom_call.1} parent=1 // pred_check
      _
    $region39: #{tpu_custom_call.1} parent=1 // pred_check_branch
      %77 = sbr.rel (0) target = $region41
    $region40: #{tpu_custom_call.1} parent=1 // pred_region
      %78 = dma.done [#allocation6], 6144
    $region41: #{tpu_custom_call.1} parent=1 // pred_fallthru
      _
    // Predicated region
    $region42: #{tpu_custom_call.1} parent=1 // pred_check
      _
    $region43: #{tpu_custom_call.1} parent=1 // pred_check_branch
      %80 = sbr.rel (0) target = $region45
    $region44: #{tpu_custom_call.1} parent=1 // pred_region
      %81 = dma.done [#allocation9], 2048
    $region45: #{tpu_custom_call.1} parent=1 // pred_fallthru
      _
    %v82 = vld [vmem:[#allocation2] sm:$0xff]
    %v83 = vld [vmem:[#allocation2 + $0x8] sm:$0xff]
    %v84 = vld [vmem:[#allocation5] sm:$0xff]
    %v85 = vld [vmem:[#allocation5 + $0x8] sm:$0xff]
    %v86 = vld [vmem:[#allocation5 + $0x10] sm:$0xff]
    %v87 = vld [vmem:[#allocation5 + $0x18] sm:$0xff]
    %v88 = vld [vmem:[#allocation5 + $0x20] sm:$0xff]
    %v89 = vld [vmem:[#allocation5 + $0x28] sm:$0xff]
    %v90 = vld [vmem:[#allocation5 + $0x30] sm:$0xff]
    %v91 = vld [vmem:[#allocation5 + $0x38] sm:$0xff]
    %v92 = vld [vmem:[#allocation5 + $0x40] sm:$0xff]
    %v93 = vld [vmem:[#allocation5 + $0x48] sm:$0xff]
    %v94 = vld [vmem:[#allocation5 + $0x50] sm:$0xff]
    %v95 = vld [vmem:[#allocation5 + $0x58] sm:$0xff]
    %v96 = vld [vmem:[#allocation5 + $0x60] sm:$0xff]
    %v97 = vld [vmem:[#allocation5 + $0x68] sm:$0xff]
    %v98 = vld [vmem:[#allocation5 + $0x70] sm:$0xff]
    %v99 = vld [vmem:[#allocation5 + $0x78] sm:$0xff]
    %v100 = vld [vmem:[%s2] sm:$0x1]
    %v102 = vlaneseq
    %v103 = vshrl.u32 %v102, 7
    %v104 = vsub.s32 0, %v103
    %v105 = vrot.slane %v100, %v104
    %107 = vmatprep.subr.mxu0 0.0
    %108 = vmatpush1.msra.mxu0 %v99
    %109 = vmatprep.subr.mxu0 0.0
    %110 = vmatpush1.msra.mxu0 %v98
    %111 = vmatprep.subr.mxu0 0.0
    %112 = vmatpush1.msra.mxu0 %v97
    %113 = vmatprep.subr.mxu0 0.0
    %114 = vmatpush1.msra.mxu0 %v96
    %115 = vmatprep.subr.mxu0 0.0
    %116 = vmatpush1.msra.mxu0 %v95
    %117 = vmatprep.subr.mxu0 0.0
    %118 = vmatpush1.msra.mxu0 %v94
    %119 = vmatprep.subr.mxu0 0.0
    %120 = vmatpush1.msra.mxu0 %v93
    %121 = vmatprep.subr.mxu0 0.0
    %122 = vmatpush1.msra.mxu0 %v92
    %123 = vmatprep.subr.mxu0 0.0
    %124 = vmatpush1.msra.mxu0 %v91
    %125 = vmatprep.subr.mxu0 0.0
    %126 = vmatpush1.msra.mxu0 %v90
    %127 = vmatprep.subr.mxu0 0.0
    %128 = vmatpush1.msra.mxu0 %v89
    %129 = vmatprep.subr.mxu0 0.0
    %130 = vmatpush1.msra.mxu0 %v88
    %131 = vmatprep.subr.mxu0 0.0
    %132 = vmatpush1.msra.mxu0 %v87
    %133 = vmatprep.subr.mxu0 0.0
    %134 = vmatpush1.msra.mxu0 %v86
    %135 = vmatprep.subr.mxu0 0.0
    %136 = vmatpush1.msra.mxu0 %v85
    %137 = vmatprep.subr.mxu0 0.0
    %138 = vmatpush1.msra.mxu0 %v84
    %139 = vmatprep.subr.mxu0 0.0
    %140 = vmatpush2.msra.mxu0 0.0
    %141 = vmatprep.subr.mxu0 0.0
    %142 = vmatpush2.msra.mxu0 0.0
    %143 = vmatprep.subr.mxu0 0.0
    %144 = vmatpush2.msra.mxu0 0.0
    %145 = vmatprep.subr.mxu0 0.0
    %146 = vmatpush2.msra.mxu0 0.0
    %147 = vmatprep.subr.mxu0 0.0
    %148 = vmatpush2.msra.mxu0 0.0
    %149 = vmatprep.subr.mxu0 0.0
    %150 = vmatpush2.msra.mxu0 0.0
    %151 = vmatprep.subr.mxu0 0.0
    %152 = vmatpush2.msra.mxu0 0.0
    %153 = vmatprep.subr.mxu0 0.0
    %154 = vmatpush2.msra.mxu0 0.0
    %155 = vmatprep.subr.mxu0 0.0
    %156 = vmatpush2.msra.mxu0 0.0
    %157 = vmatprep.subr.mxu0 0.0
    %158 = vmatpush2.msra.mxu0 0.0
    %159 = vmatprep.subr.mxu0 0.0
    %160 = vmatpush2.msra.mxu0 0.0
    %161 = vmatprep.subr.mxu0 0.0
    %162 = vmatpush2.msra.mxu0 0.0
    %163 = vmatprep.subr.mxu0 0.0
    %164 = vmatpush2.msra.mxu0 0.0
    %165 = vmatprep.subr.mxu0 0.0
    %166 = vmatpush2.msra.mxu0 0.0
    %167 = vmatprep.subr.mxu0 0.0
    %168 = vmatpush2.msra.mxu0 0.0
    %169 = vmatprep.subr.mxu0 0.0
    %170 = vmatpush2.msra.mxu0 0.0
    %171 = vmatprep.mubr.f32.mxu0 0.0
    %172 = vmatmul.mubr.f32.gmra.mxu0 %v82
    %v173 = vpop.f32.mrf.mxu0
    %v174 = vadd.f32 %v105, %v173
    %v175 = vpop.f32.mrf.mxu0
    %176 = vmatprep.mubr.f32.mxu0 0.0
    %177 = vmatmul.mubr.f32.gmra.mxu0 %v83
    %v178 = vpop.f32.mrf.mxu0
    %v179 = vadd.f32 %v105, %v178
    %v180 = vpop.f32.mrf.mxu0
    %181 = vdwg.mxu0
    %v182 = vmax.f32 %v174, 0.0
    %v183 = vmax.f32 %v179, 0.0
    %v184 = vld [vmem:[%s4] sm:$0x1]
    %v185 = vld [vmem:[%s4 + $0x1] sm:$0x1]
    %v186 = vld [vmem:[%s4 + $0x2] sm:$0x1]
    %v187 = vld [vmem:[#allocation7] sm:$0xff]
    %v188 = vld [vmem:[#allocation7 + $0x8] sm:$0xff]
    %v189 = vld [vmem:[#allocation7 + $0x10] sm:$0xff]
    %v190 = vld [vmem:[#allocation7 + $0x18] sm:$0xff]
    %v191 = vld [vmem:[#allocation7 + $0x20] sm:$0xff]
    %v192 = vld [vmem:[#allocation7 + $0x28] sm:$0xff]
    %v193 = vld [vmem:[#allocation7 + $0x30] sm:$0xff]
    %v194 = vld [vmem:[#allocation7 + $0x38] sm:$0xff]
    %v195 = vld [vmem:[#allocation7 + $0x40] sm:$0xff]
    %v196 = vld [vmem:[#allocation7 + $0x48] sm:$0xff]
    %v197 = vld [vmem:[#allocation7 + $0x50] sm:$0xff]
    %v198 = vld [vmem:[#allocation7 + $0x58] sm:$0xff]
    %v199 = vld [vmem:[#allocation7 + $0x60] sm:$0xff]
    %v200 = vld [vmem:[#allocation7 + $0x68] sm:$0xff]
    %v201 = vld [vmem:[#allocation7 + $0x70] sm:$0xff]
    %v202 = vld [vmem:[#allocation7 + $0x78] sm:$0xff]
    %v204 = vlaneseq
    %v205 = vshrl.u32 %v204, 7
    %v206 = vsub.s32 0, %v205
    %v207 = vrot.slane %v184, %v206
    %209 = vmatprep.subr.mxu0 0.0
    %210 = vmatpush1.msra.mxu0 %v202
    %211 = vmatprep.subr.mxu0 0.0
    %212 = vmatpush1.msra.mxu0 %v201
    %213 = vmatprep.subr.mxu0 0.0
    %214 = vmatpush1.msra.mxu0 %v200
    %215 = vmatprep.subr.mxu0 0.0
    %216 = vmatpush1.msra.mxu0 %v199
    %217 = vmatprep.subr.mxu0 0.0
    %218 = vmatpush1.msra.mxu0 %v198
    %219 = vmatprep.subr.mxu0 0.0
    %220 = vmatpush1.msra.mxu0 %v197
    %221 = vmatprep.subr.mxu0 0.0
    %222 = vmatpush1.msra.mxu0 %v196
    %223 = vmatprep.subr.mxu0 0.0
    %224 = vmatpush1.msra.mxu0 %v195
    %225 = vmatprep.subr.mxu0 0.0
    %226 = vmatpush1.msra.mxu0 %v194
    %227 = vmatprep.subr.mxu0 0.0
    %228 = vmatpush1.msra.mxu0 %v193
    %229 = vmatprep.subr.mxu0 0.0
    %230 = vmatpush1.msra.mxu0 %v192
    %231 = vmatprep.subr.mxu0 0.0
    %232 = vmatpush1.msra.mxu0 %v191
    %233 = vmatprep.subr.mxu0 0.0
    %234 = vmatpush1.msra.mxu0 %v190
    %235 = vmatprep.subr.mxu0 0.0
    %236 = vmatpush1.msra.mxu0 %v189
    %237 = vmatprep.subr.mxu0 0.0
    %238 = vmatpush1.msra.mxu0 %v188
    %239 = vmatprep.subr.mxu0 0.0
    %240 = vmatpush1.msra.mxu0 %v187
    %241 = vmatprep.subr.mxu0 0.0
    %242 = vmatpush2.msra.mxu0 0.0
    %243 = vmatprep.subr.mxu0 0.0
    %244 = vmatpush2.msra.mxu0 0.0
    %245 = vmatprep.subr.mxu0 0.0
    %246 = vmatpush2.msra.mxu0 0.0
    %247 = vmatprep.subr.mxu0 0.0
    %248 = vmatpush2.msra.mxu0 0.0
    %249 = vmatprep.subr.mxu0 0.0
    %250 = vmatpush2.msra.mxu0 0.0
    %251 = vmatprep.subr.mxu0 0.0
    %252 = vmatpush2.msra.mxu0 0.0
    %253 = vmatprep.subr.mxu0 0.0
    %254 = vmatpush2.msra.mxu0 0.0
    %255 = vmatprep.subr.mxu0 0.0
    %256 = vmatpush2.msra.mxu0 0.0
    %257 = vmatprep.subr.mxu0 0.0
    %258 = vmatpush2.msra.mxu0 0.0
    %259 = vmatprep.subr.mxu0 0.0
    %260 = vmatpush2.msra.mxu0 0.0
    %261 = vmatprep.subr.mxu0 0.0
    %262 = vmatpush2.msra.mxu0 0.0
    %263 = vmatprep.subr.mxu0 0.0
    %264 = vmatpush2.msra.mxu0 0.0
    %265 = vmatprep.subr.mxu0 0.0
    %266 = vmatpush2.msra.mxu0 0.0
    %267 = vmatprep.subr.mxu0 0.0
    %268 = vmatpush2.msra.mxu0 0.0
    %269 = vmatprep.subr.mxu0 0.0
    %270 = vmatpush2.msra.mxu0 0.0
    %271 = vmatprep.subr.mxu0 0.0
    %272 = vmatpush2.msra.mxu0 0.0
    %273 = vmatprep.mubr.f32.mxu0 0.0
    %274 = vmatmul.mubr.f32.gmra.mxu0 %v182
    %v275 = vpop.f32.mrf.mxu0
    %v276 = vadd.f32 %v207, %v275
    %v277 = vpop.f32.mrf.mxu0
    %278 = vmatprep.mubr.f32.mxu0 0.0
    %279 = vmatmul.mubr.f32.gmra.mxu0 %v183
    %v280 = vpop.f32.mrf.mxu0
    %v281 = vadd.f32 %v207, %v280
    %v282 = vpop.f32.mrf.mxu0
    %283 = vdwg.mxu0
    %v284 = vmax.f32 %v276, 0.0
    %v285 = vmax.f32 %v281, 0.0
    %s286 = scalar_lea.vmem [#allocation7], 128
    %v287 = vld [vmem:[%s286] sm:$0xff]
    %v288 = vld [vmem:[%s286 + $0x8] sm:$0xff]
    %v289 = vld [vmem:[%s286 + $0x10] sm:$0xff]
    %v290 = vld [vmem:[%s286 + $0x18] sm:$0xff]
    %v291 = vld [vmem:[%s286 + $0x20] sm:$0xff]
    %v292 = vld [vmem:[%s286 + $0x28] sm:$0xff]
    %v293 = vld [vmem:[%s286 + $0x30] sm:$0xff]
    %v294 = vld [vmem:[%s286 + $0x38] sm:$0xff]
    %v295 = vld [vmem:[%s286 + $0x40] sm:$0xff]
    %v296 = vld [vmem:[%s286 + $0x48] sm:$0xff]
    %v297 = vld [vmem:[%s286 + $0x50] sm:$0xff]
    %v298 = vld [vmem:[%s286 + $0x58] sm:$0xff]
    %v299 = vld [vmem:[%s286 + $0x60] sm:$0xff]
    %v300 = vld [vmem:[%s286 + $0x68] sm:$0xff]
    %v301 = vld [vmem:[%s286 + $0x70] sm:$0xff]
    %v302 = vld [vmem:[%s286 + $0x78] sm:$0xff]
    %v304 = vlaneseq
    %v305 = vshrl.u32 %v304, 7
    %v306 = vsub.s32 0, %v305
    %v307 = vrot.slane %v185, %v306
    %309 = vmatprep.subr.mxu0 0.0
    %310 = vmatpush1.msra.mxu0 %v302
    %311 = vmatprep.subr.mxu0 0.0
    %312 = vmatpush1.msra.mxu0 %v301
    %313 = vmatprep.subr.mxu0 0.0
    %314 = vmatpush1.msra.mxu0 %v300
    %315 = vmatprep.subr.mxu0 0.0
    %316 = vmatpush1.msra.mxu0 %v299
    %317 = vmatprep.subr.mxu0 0.0
    %318 = vmatpush1.msra.mxu0 %v298
    %319 = vmatprep.subr.mxu0 0.0
    %320 = vmatpush1.msra.mxu0 %v297
    %321 = vmatprep.subr.mxu0 0.0
    %322 = vmatpush1.msra.mxu0 %v296
    %323 = vmatprep.subr.mxu0 0.0
    %324 = vmatpush1.msra.mxu0 %v295
    %325 = vmatprep.subr.mxu0 0.0
    %326 = vmatpush1.msra.mxu0 %v294
    %327 = vmatprep.subr.mxu0 0.0
    %328 = vmatpush1.msra.mxu0 %v293
    %329 = vmatprep.subr.mxu0 0.0
    %330 = vmatpush1.msra.mxu0 %v292
    %331 = vmatprep.subr.mxu0 0.0
    %332 = vmatpush1.msra.mxu0 %v291
    %333 = vmatprep.subr.mxu0 0.0
    %334 = vmatpush1.msra.mxu0 %v290
    %335 = vmatprep.subr.mxu0 0.0
    %336 = vmatpush1.msra.mxu0 %v289
    %337 = vmatprep.subr.mxu0 0.0
    %338 = vmatpush1.msra.mxu0 %v288
    %339 = vmatprep.subr.mxu0 0.0
    %340 = vmatpush1.msra.mxu0 %v287
    %341 = vmatprep.subr.mxu0 0.0
    %342 = vmatpush2.msra.mxu0 0.0
    %343 = vmatprep.subr.mxu0 0.0
    %344 = vmatpush2.msra.mxu0 0.0
    %345 = vmatprep.subr.mxu0 0.0
    %346 = vmatpush2.msra.mxu0 0.0
    %347 = vmatprep.subr.mxu0 0.0
    %348 = vmatpush2.msra.mxu0 0.0
    %349 = vmatprep.subr.mxu0 0.0
    %350 = vmatpush2.msra.mxu0 0.0
    %351 = vmatprep.subr.mxu0 0.0
    %352 = vmatpush2.msra.mxu0 0.0
    %353 = vmatprep.subr.mxu0 0.0
    %354 = vmatpush2.msra.mxu0 0.0
    %355 = vmatprep.subr.mxu0 0.0
    %356 = vmatpush2.msra.mxu0 0.0
    %357 = vmatprep.subr.mxu0 0.0
    %358 = vmatpush2.msra.mxu0 0.0
    %359 = vmatprep.subr.mxu0 0.0
    %360 = vmatpush2.msra.mxu0 0.0
    %361 = vmatprep.subr.mxu0 0.0
    %362 = vmatpush2.msra.mxu0 0.0
    %363 = vmatprep.subr.mxu0 0.0
    %364 = vmatpush2.msra.mxu0 0.0
    %365 = vmatprep.subr.mxu0 0.0
    %366 = vmatpush2.msra.mxu0 0.0
    %367 = vmatprep.subr.mxu0 0.0
    %368 = vmatpush2.msra.mxu0 0.0
    %369 = vmatprep.subr.mxu0 0.0
    %370 = vmatpush2.msra.mxu0 0.0
    %371 = vmatprep.subr.mxu0 0.0
    %372 = vmatpush2.msra.mxu0 0.0
    %373 = vmatprep.mubr.f32.mxu0 0.0
    %374 = vmatmul.mubr.f32.gmra.mxu0 %v284
    %v375 = vpop.f32.mrf.mxu0
    %v376 = vadd.f32 %v307, %v375
    %v377 = vpop.f32.mrf.mxu0
    %378 = vmatprep.mubr.f32.mxu0 0.0
    %379 = vmatmul.mubr.f32.gmra.mxu0 %v285
    %v380 = vpop.f32.mrf.mxu0
    %v381 = vadd.f32 %v307, %v380
    %v382 = vpop.f32.mrf.mxu0
    %383 = vdwg.mxu0
    %v384 = vmax.f32 %v376, 0.0
    %v385 = vmax.f32 %v381, 0.0
    %s386 = scalar_lea.vmem [#allocation7], 256
    %v387 = vld [vmem:[%s386] sm:$0xff]
    %v388 = vld [vmem:[%s386 + $0x8] sm:$0xff]
    %v389 = vld [vmem:[%s386 + $0x10] sm:$0xff]
    %v390 = vld [vmem:[%s386 + $0x18] sm:$0xff]
    %v391 = vld [vmem:[%s386 + $0x20] sm:$0xff]
    %v392 = vld [vmem:[%s386 + $0x28] sm:$0xff]
    %v393 = vld [vmem:[%s386 + $0x30] sm:$0xff]
    %v394 = vld [vmem:[%s386 + $0x38] sm:$0xff]
    %v395 = vld [vmem:[%s386 + $0x40] sm:$0xff]
    %v396 = vld [vmem:[%s386 + $0x48] sm:$0xff]
    %v397 = vld [vmem:[%s386 + $0x50] sm:$0xff]
    %v398 = vld [vmem:[%s386 + $0x58] sm:$0xff]
    %v399 = vld [vmem:[%s386 + $0x60] sm:$0xff]
    %v400 = vld [vmem:[%s386 + $0x68] sm:$0xff]
    %v401 = vld [vmem:[%s386 + $0x70] sm:$0xff]
    %v402 = vld [vmem:[%s386 + $0x78] sm:$0xff]
    %v404 = vlaneseq
    %v405 = vshrl.u32 %v404, 7
    %v406 = vsub.s32 0, %v405
    %v407 = vrot.slane %v186, %v406
    %409 = vmatprep.subr.mxu0 0.0
    %410 = vmatpush1.msra.mxu0 %v402
    %411 = vmatprep.subr.mxu0 0.0
    %412 = vmatpush1.msra.mxu0 %v401
    %413 = vmatprep.subr.mxu0 0.0
    %414 = vmatpush1.msra.mxu0 %v400
    %415 = vmatprep.subr.mxu0 0.0
    %416 = vmatpush1.msra.mxu0 %v399
    %417 = vmatprep.subr.mxu0 0.0
    %418 = vmatpush1.msra.mxu0 %v398
    %419 = vmatprep.subr.mxu0 0.0
    %420 = vmatpush1.msra.mxu0 %v397
    %421 = vmatprep.subr.mxu0 0.0
    %422 = vmatpush1.msra.mxu0 %v396
    %423 = vmatprep.subr.mxu0 0.0
    %424 = vmatpush1.msra.mxu0 %v395
    %425 = vmatprep.subr.mxu0 0.0
    %426 = vmatpush1.msra.mxu0 %v394
    %427 = vmatprep.subr.mxu0 0.0
    %428 = vmatpush1.msra.mxu0 %v393
    %429 = vmatprep.subr.mxu0 0.0
    %430 = vmatpush1.msra.mxu0 %v392
    %431 = vmatprep.subr.mxu0 0.0
    %432 = vmatpush1.msra.mxu0 %v391
    %433 = vmatprep.subr.mxu0 0.0
    %434 = vmatpush1.msra.mxu0 %v390
    %435 = vmatprep.subr.mxu0 0.0
    %436 = vmatpush1.msra.mxu0 %v389
    %437 = vmatprep.subr.mxu0 0.0
    %438 = vmatpush1.msra.mxu0 %v388
    %439 = vmatprep.subr.mxu0 0.0
    %440 = vmatpush1.msra.mxu0 %v387
    %441 = vmatprep.subr.mxu0 0.0
    %442 = vmatpush2.msra.mxu0 0.0
    %443 = vmatprep.subr.mxu0 0.0
    %444 = vmatpush2.msra.mxu0 0.0
    %445 = vmatprep.subr.mxu0 0.0
    %446 = vmatpush2.msra.mxu0 0.0
    %447 = vmatprep.subr.mxu0 0.0
    %448 = vmatpush2.msra.mxu0 0.0
    %449 = vmatprep.subr.mxu0 0.0
    %450 = vmatpush2.msra.mxu0 0.0
    %451 = vmatprep.subr.mxu0 0.0
    %452 = vmatpush2.msra.mxu0 0.0
    %453 = vmatprep.subr.mxu0 0.0
    %454 = vmatpush2.msra.mxu0 0.0
    %455 = vmatprep.subr.mxu0 0.0
    %456 = vmatpush2.msra.mxu0 0.0
    %457 = vmatprep.subr.mxu0 0.0
    %458 = vmatpush2.msra.mxu0 0.0
    %459 = vmatprep.subr.mxu0 0.0
    %460 = vmatpush2.msra.mxu0 0.0
    %461 = vmatprep.subr.mxu0 0.0
    %462 = vmatpush2.msra.mxu0 0.0
    %463 = vmatprep.subr.mxu0 0.0
    %464 = vmatpush2.msra.mxu0 0.0
    %465 = vmatprep.subr.mxu0 0.0
    %466 = vmatpush2.msra.mxu0 0.0
    %467 = vmatprep.subr.mxu0 0.0
    %468 = vmatpush2.msra.mxu0 0.0
    %469 = vmatprep.subr.mxu0 0.0
    %470 = vmatpush2.msra.mxu0 0.0
    %471 = vmatprep.subr.mxu0 0.0
    %472 = vmatpush2.msra.mxu0 0.0
    %473 = vmatprep.mubr.f32.mxu0 0.0
    %474 = vmatmul.mubr.f32.gmra.mxu0 %v384
    %v475 = vpop.f32.mrf.mxu0
    %v476 = vadd.f32 %v407, %v475
    %v477 = vpop.f32.mrf.mxu0
    %478 = vmatprep.mubr.f32.mxu0 0.0
    %479 = vmatmul.mubr.f32.gmra.mxu0 %v385
    %v480 = vpop.f32.mrf.mxu0
    %v481 = vadd.f32 %v407, %v480
    %v482 = vpop.f32.mrf.mxu0
    %483 = vdwg.mxu0
    %v484 = vmax.f32 %v476, 0.0
    %v485 = vmax.f32 %v481, 0.0
    %v486 = vld [vmem:[#allocation8] sm:$0xff]
    %v487 = vld [vmem:[#allocation8 + $0x8] sm:$0xff]
    %v488 = vld [vmem:[#allocation8 + $0x10] sm:$0xff]
    %v489 = vld [vmem:[#allocation8 + $0x18] sm:$0xff]
    %v490 = vld [vmem:[#allocation8 + $0x20] sm:$0xff]
    %v491 = vld [vmem:[#allocation8 + $0x28] sm:$0xff]
    %v492 = vld [vmem:[#allocation8 + $0x30] sm:$0xff]
    %v493 = vld [vmem:[#allocation8 + $0x38] sm:$0xff]
    %v494 = vld [vmem:[#allocation8 + $0x40] sm:$0xff]
    %v495 = vld [vmem:[#allocation8 + $0x48] sm:$0xff]
    %v496 = vld [vmem:[#allocation8 + $0x50] sm:$0xff]
    %v497 = vld [vmem:[#allocation8 + $0x58] sm:$0xff]
    %v498 = vld [vmem:[#allocation8 + $0x60] sm:$0xff]
    %v499 = vld [vmem:[#allocation8 + $0x68] sm:$0xff]
    %v500 = vld [vmem:[#allocation8 + $0x70] sm:$0xff]
    %v501 = vld [vmem:[#allocation8 + $0x78] sm:$0xff]
    %v502 = vld [vmem:[%s6] sm:$0x1]
    %v504 = vlaneseq
    %v505 = vshrl.u32 %v504, 7
    %v506 = vsub.s32 0, %v505
    %v507 = vrot.slane %v502, %v506
    %509 = vmatprep.subr.mxu0 0.0
    %510 = vmatpush1.msra.mxu0 %v501
    %511 = vmatprep.subr.mxu0 0.0
    %512 = vmatpush1.msra.mxu0 %v500
    %513 = vmatprep.subr.mxu0 0.0
    %514 = vmatpush1.msra.mxu0 %v499
    %515 = vmatprep.subr.mxu0 0.0
    %516 = vmatpush1.msra.mxu0 %v498
    %517 = vmatprep.subr.mxu0 0.0
    %518 = vmatpush1.msra.mxu0 %v497
    %519 = vmatprep.subr.mxu0 0.0
    %520 = vmatpush1.msra.mxu0 %v496
    %521 = vmatprep.subr.mxu0 0.0
    %522 = vmatpush1.msra.mxu0 %v495
    %523 = vmatprep.subr.mxu0 0.0
    %524 = vmatpush1.msra.mxu0 %v494
    %525 = vmatprep.subr.mxu0 0.0
    %526 = vmatpush1.msra.mxu0 %v493
    %527 = vmatprep.subr.mxu0 0.0
    %528 = vmatpush1.msra.mxu0 %v492
    %529 = vmatprep.subr.mxu0 0.0
    %530 = vmatpush1.msra.mxu0 %v491
    %531 = vmatprep.subr.mxu0 0.0
    %532 = vmatpush1.msra.mxu0 %v490
    %533 = vmatprep.subr.mxu0 0.0
    %534 = vmatpush1.msra.mxu0 %v489
    %535 = vmatprep.subr.mxu0 0.0
    %536 = vmatpush1.msra.mxu0 %v488
    %537 = vmatprep.subr.mxu0 0.0
    %538 = vmatpush1.msra.mxu0 %v487
    %539 = vmatprep.subr.mxu0 0.0
    %540 = vmatpush1.msra.mxu0 %v486
    %541 = vmatprep.subr.mxu0 0.0
    %542 = vmatpush2.msra.mxu0 0.0
    %543 = vmatprep.subr.mxu0 0.0
    %544 = vmatpush2.msra.mxu0 0.0
    %545 = vmatprep.subr.mxu0 0.0
    %546 = vmatpush2.msra.mxu0 0.0
    %547 = vmatprep.subr.mxu0 0.0
    %548 = vmatpush2.msra.mxu0 0.0
    %549 = vmatprep.subr.mxu0 0.0
    %550 = vmatpush2.msra.mxu0 0.0
    %551 = vmatprep.subr.mxu0 0.0
    %552 = vmatpush2.msra.mxu0 0.0
    %553 = vmatprep.subr.mxu0 0.0
    %554 = vmatpush2.msra.mxu0 0.0
    %555 = vmatprep.subr.mxu0 0.0
    %556 = vmatpush2.msra.mxu0 0.0
    %557 = vmatprep.subr.mxu0 0.0
    %558 = vmatpush2.msra.mxu0 0.0
    %559 = vmatprep.subr.mxu0 0.0
    %560 = vmatpush2.msra.mxu0 0.0
    %561 = vmatprep.subr.mxu0 0.0
    %562 = vmatpush2.msra.mxu0 0.0
    %563 = vmatprep.subr.mxu0 0.0
    %564 = vmatpush2.msra.mxu0 0.0
    %565 = vmatprep.subr.mxu0 0.0
    %566 = vmatpush2.msra.mxu0 0.0
    %567 = vmatprep.subr.mxu0 0.0
    %568 = vmatpush2.msra.mxu0 0.0
    %569 = vmatprep.subr.mxu0 0.0
    %570 = vmatpush2.msra.mxu0 0.0
    %571 = vmatprep.subr.mxu0 0.0
    %572 = vmatpush2.msra.mxu0 0.0
    %573 = vmatprep.mubr.f32.mxu0 0.0
    %574 = vmatmul.mubr.f32.gmra.mxu0 %v484
    %v575 = vpop.f32.mrf.mxu0
    %v576 = vadd.f32 %v507, %v575
    %v577 = vpop.f32.mrf.mxu0
    %578 = vmatprep.mubr.f32.mxu0 0.0
    %579 = vmatmul.mubr.f32.gmra.mxu0 %v485
    %v580 = vpop.f32.mrf.mxu0
    %v581 = vadd.f32 %v507, %v580
    %v582 = vpop.f32.mrf.mxu0
    %583 = vdwg.mxu0
    %584 = vst [vmem:[#allocation10] sm:$0xff] %v576
    %585 = vst [vmem:[#allocation10 + $0x8] sm:$0xff] %v581
    // Predicated region
    $region46: #{tpu_custom_call.1} parent=1 // pred_check
      _
    $region47: #{tpu_custom_call.1} parent=1 // pred_check_branch
      %587 = sbr.rel (0) target = $region49
    $region48: #{tpu_custom_call.1} parent=1 // pred_region
      %s589 = ssub.s32 256, 256
      %590 = vsyncadd [#allocation4], %s589
      %s591 = sshll.u32 [#allocation10], 4
      %s592 = int_to_ptr.vmem [resolvable:$true] %s591
      %597 = dma.vmem_to_hbm [thread:$0]  %s592, 256, %s7, [#allocation4], 128, 128, 8
    $region49: #{tpu_custom_call.1} parent=1 // pred_fallthru
      _
    // Predicated region
    $region50: #{tpu_custom_call.1} parent=1 // pred_check
      _
    $region51: #{tpu_custom_call.1} parent=1 // pred_check_branch
      %599 = sbr.rel (0) target = $region53
    $region52: #{tpu_custom_call.1} parent=1 // pred_region
      %600 = dma.done [#allocation4], 256
    $region53: #{tpu_custom_call.1} parent=1 // pred_fallthru
      _
    %601 = vsyncpa [#allocation3], 1
    %602 = vsyncpa [#allocation6], 1
    %603 = vsyncpa [#allocation9], 1
    %604 = vsyncpa [#allocation4], 1

</llo_original>
